<compile_context>
chip_gen: v7x
topology: tpu7x:2x2x1
jax: 0.10.0
libtpu: 0.0.40
codegen_flags: <defaults>
</compile_context>

<pallas_src>
import jax
import jax.numpy as jnp
from jax.experimental import pallas as pl
from jax.experimental.pallas import tpu as pltpu


_LANE = 128
_SLAB_WIDTH = 4 * _LANE            # 512 lanes: lane-dense, unmasked stores
_SMALL_N_BYPASS = 16384            # below this, plain XLA fusion beats a launch
_KERNEL_DTYPES = (jnp.dtype(jnp.float32), jnp.dtype(jnp.bfloat16),
                  jnp.dtype(jnp.float16))


def _affine_kernel(ab_ref, x_ref, o_ref):
    # ab_ref: SMEM scalar buffer [a, b] (f32); x_ref / o_ref: VMEM tiles.
    a = ab_ref[0]
    b = ab_ref[1]
    x = x_ref[...].astype(jnp.float32)            # f32 compute in-register
    o_ref[...] = (x * a + b).astype(o_ref.dtype)  # store in native dtype


def _round_up(x, m):
    return ((x + m - 1) // m) * m


def _tpu_generation_params():
    """Returns (dimension_semantics, max_block_rows, vmem_limit_bytes)."""
    try:
        kind = jax.devices()[0].device_kind.lower()
    except Exception:
        kind = ""
    if "7" in kind:
        # v7x: 2 TensorCores/chip, 64 MiB VMEM per TC.  Use true core-level
        # sharding and <=4 MiB f32 tiles so double-buffered in+out fits easily.
        sem = getattr(pltpu, "CORE_PARALLEL", "parallel")
        return (sem,), 2048, 48 * 1024 * 1024
    # v5e / v6e: single TC, 128 MiB physical VMEM -> bigger tiles are free.
    return ("parallel",), 4096, 64 * 1024 * 1024


def regression_model_forward(x, a, b):
    """Computes x * a + b (scalar a, b) -- RegressionModel.forward.

    Float32/bf16/f16 inputs keep their dtype end-to-end; other dtypes fall
    back to plain JAX with torch-like float promotion.
    """
    x = jnp.asarray(x)
    a32 = jnp.asarray(a, dtype=jnp.float32).reshape(())
    b32 = jnp.asarray(b, dtype=jnp.float32).reshape(())

    if jnp.dtype(x.dtype) not in _KERNEL_DTYPES:
        # Integer / wide-float inputs: let XLA handle promotion (matches torch).
        return x * a32 + b32

    n = x.size
    if n < _SMALL_N_BYPASS:
        # Launch overhead would dwarf the op; XLA fuses the affine for free.
        return (x.astype(jnp.float32) * a32 + b32).astype(x.dtype)

    orig_shape = x.shape
    out_dtype = x.dtype
    sems, max_rows, vmem_limit = _tpu_generation_params()

    w = _SLAB_WIDTH
    xf = x.reshape(-1)
    aligned = (n % w) == 0
    if aligned:
        rows = n // w                      # zero-copy: reshape is a bitcast
        x2d = xf.reshape(rows, w)
    else:
        # Pad only the ragged tail (at most 16*512 elements).
        rows = _round_up(pl.cdiv(n, w), 16)
        xf = jnp.pad(xf, (0, rows * w - n))
        x2d = xf.reshape(rows, w)

    block_rows = min(max_rows, _round_up(rows, 16))
    grid = (pl.cdiv(rows, block_rows),)    # trailing ragged tile is masked

    ab = jnp.stack([a32, b32])

    out2d = pl.pallas_call(
        _affine_kernel,
        out_shape=jax.ShapeDtypeStruct((rows, w), out_dtype),
        grid_spec=pltpu.PrefetchScalarGridSpec(
            num_scalar_prefetch=0,
            grid=grid,
            in_specs=[
                pl.BlockSpec(memory_space=pltpu.SMEM),            # [a, b]
                pl.BlockSpec((block_rows, w), lambda i: (i, 0)),  # x tile
            ],
            out_specs=pl.BlockSpec((block_rows, w), lambda i: (i, 0)),
        ),
        compiler_params=pltpu.CompilerParams(
            dimension_semantics=sems,
            vmem_limit_bytes=vmem_limit,
        ),
    )(ab, x2d)

    if aligned:
        return out2d.reshape(orig_shape)
    return out2d.reshape(-1)[:n].reshape(orig_shape)


if __name__ == "__main__":
    # Parameters matching the typical test setup of RegressionModel(a=2, b=3).
    # TODO(synk): the module's one-time dtype print (self.first_batch) is a
    # host-side side effect with no kernel equivalent; omitted.
    a = jnp.float32(2.0)
    b = jnp.float32(3.0)

    key = jax.random.PRNGKey(0)
    k0, k1, k2, k3 = jax.random.split(key, 4)

    # 1) Small 1-D batch of scalar samples (RegressionDataset shape):
    #    exercises the small-input bypass.
    x1 = jax.random.normal(k0, (64,), dtype=jnp.float32)
    y1 = jax.block_until_ready(regression_model_forward(x1, a, b))
    assert jnp.allclose(y1, x1 * a + b, atol=1e-6), "mismatch (1-D bypass)"

    # 2) Aligned f32 input: zero-copy kernel fast path.
    x2 = jax.random.normal(k1, (64, 512), dtype=jnp.float32)
    y2 = jax.block_until_ready(regression_model_forward(x2, a, b))
    assert jnp.allclose(y2, x2 * a + b, atol=1e-6), "mismatch (aligned f32)"

    # 3) Misaligned size: minimal-pad + ragged-tile kernel path.
    x3 = jax.random.normal(k2, (63, 517), dtype=jnp.float32)
    y3 = jax.block_until_ready(regression_model_forward(x3, a, b))
    assert jnp.allclose(y3, x3 * a + b, atol=1e-6), "mismatch (misaligned f32)"

    # 4) bf16 input stays bf16 end-to-end through the kernel.
    x4 = jax.random.normal(k3, (128, 512), dtype=jnp.bfloat16)
    y4 = jax.block_until_ready(regression_model_forward(x4, a, b))
    ref4 = (x4.astype(jnp.float32) * a + b).astype(jnp.bfloat16)
    assert y4.dtype == jnp.bfloat16
    assert jnp.allclose(y4.astype(jnp.float32), ref4.astype(jnp.float32),
                        atol=1e-2), "mismatch (bf16)"

    print("KERNEL_OK")
</pallas_src>

<mosaic_0001>
module attributes {stable_mosaic.version = 11 : i64} {
  func.func @_affine_kernel(%arg0: i32, %arg1: memref<2xf32, #tpu.memory_space<smem>>, %arg2: memref<64x512xf32, #tpu.memory_space<vmem>>, %arg3: memref<64x512xf32, #tpu.memory_space<vmem>>) attributes {dimension_semantics = [#tpu.dimension_semantics<parallel>], iteration_bounds = array<i64: 1>, scalar_prefetch = 0 : i64, scratch_operands = 0 : i64, tpu.core_type = #tpu.core_type<tc>, window_params = [{transform_indices = @transform_0, window_bounds = array<i64: 2>}, {transform_indices = @transform_1, window_bounds = array<i64: 64, 512>}, {transform_indices = @transform_2, window_bounds = array<i64: 64, 512>}]} {
    %c0 = arith.constant 0 : index
    %0 = memref.load %arg1[%c0] : memref<2xf32, #tpu.memory_space<smem>>
    %c1 = arith.constant 1 : index
    %1 = memref.load %arg1[%c1] : memref<2xf32, #tpu.memory_space<smem>>
    %c0_0 = arith.constant 0 : index
    %c0_1 = arith.constant 0 : index
    %2 = vector.load %arg2[%c0_0, %c0_1] : memref<64x512xf32, #tpu.memory_space<vmem>>, vector<64x512xf32>
    %3 = vector.broadcast %0 : f32 to vector<64x512xf32>
    %4 = arith.mulf %2, %3 : vector<64x512xf32>
    %5 = vector.broadcast %1 : f32 to vector<64x512xf32>
    %6 = arith.addf %4, %5 : vector<64x512xf32>
    %c0_2 = arith.constant 0 : index
    %c0_3 = arith.constant 0 : index
    %7 = vector.load %arg3[%c0_2, %c0_3] : memref<64x512xf32, #tpu.memory_space<vmem>>, vector<64x512xf32>
    tpu.vector_store %arg3[%c0_2, %c0_3], %6 {strides = array<i32>} : memref<64x512xf32, #tpu.memory_space<vmem>>, vector<64x512xf32>,
    return
  }
  func.func @transform_0(%arg0: i32) -> i32 {
    %c0_i32 = arith.constant 0 : i32
    %c0_i32_0 = arith.constant 0 : i32
    return %c0_i32 : i32
  }
  func.func @transform_1(%arg0: i32) -> (i32, i32) {
    %c0_i32 = arith.constant 0 : i32
    %c0_i32_0 = arith.constant 0 : i32
    return %arg0, %c0_i32 : i32, i32
  }
  func.func @transform_2(%arg0: i32) -> (i32, i32) {
    %c0_i32 = arith.constant 0 : i32
    %c0_i32_0 = arith.constant 0 : i32
    return %arg0, %c0_i32 : i32, i32
  }
}

</mosaic_0001>

<llo_original>
// kernel: tpu_custom_call.1
$region0: #{tpu_custom_call.1}
  #allocation0 [shape = 'u32[]', space=smem, size = 0x4, offset = 0x4, fixed_abs, tag = 'smem constant byte address 0x4 - core index']
  #allocation1 [shape = 'u32[144,128]{1,0:T(1,128)}', space=vmem, size = 0x12000, scoped, tag = 'internal scratch']
  %s0 = inlined_call_operand.hbm [shape: f32[2], index: 0, kind: input, shape index: {}]
  %s1 = inlined_call_operand.hbm [shape: f32[64,512], index: 1, kind: input, shape index: {}]
  %s2 = inlined_call_operand.hbm [shape: f32[64,512], index: 2, kind: output, shape index: {}]
  %s3 = sld [smem:[#allocation0]]
  $region26: #{tpu_custom_call.1} parent=0
    _
  %s5 = ssub.s32 1, %s3
  %s6 = scalar_select 0, %s5, %s3
  $region1: #{tpu_custom_call.1} parent=0
    #allocation2 [shape = 'u8[512]{0}', space=smem, size = 0x200, scoped, tag = 'input window, operand 0, single buffered']
    #allocation3 [shape = 's32[1]{0}', space=sflag, size = 0x4, scoped, tag = 'scoped memory for tpu_custom_call.1']
    #allocation4 [shape = 's32[1]{0}', space=sflag, size = 0x4, scoped, tag = 'scoped memory for tpu_custom_call.1']
    #allocation5 [shape = 's32[1]{0}', space=sflag, size = 0x4, scoped, tag = 'scoped memory for tpu_custom_call.1']
    #allocation6 [shape = 'u8[131072]{0}', space=vmem, size = 0x20000, scoped, tag = 'input window, operand 1, single buffered']
    #allocation7 [shape = 'u8[131072]{0}', space=vmem, size = 0x20000, scoped, tag = 'output window, operand 0, single buffered']
    %7 = vsyncpa [#allocation5], 0
    %8 = vsyncpa [#allocation3], 0
    %9 = vsyncpa [#allocation4], 0
    // Predicated region
    $region2: #{tpu_custom_call.1} parent=1 // pred_check
      _
    $region3: #{tpu_custom_call.1} parent=1 // pred_check_branch
      %11 = sbr.rel (0) target = $region5
    $region4: #{tpu_custom_call.1} parent=1 // pred_region
      %s13 = ssub.s32 16, 16
      %14 = vsyncadd [#allocation5], %s13
      %17 = dma.hbm_to_smem %s0, 16, [#allocation2], [#allocation5]
    $region5: #{tpu_custom_call.1} parent=1 // pred_fallthru
      _
    // Predicated region
    $region6: #{tpu_custom_call.1} parent=1 // pred_check
      _
    $region7: #{tpu_custom_call.1} parent=1 // pred_check_branch
      %19 = sbr.rel (0) target = $region9
    $region8: #{tpu_custom_call.1} parent=1 // pred_region
      %s21 = ssub.s32 4096, 4096
      %22 = vsyncadd [#allocation3], %s21
      %s23 = sshll.u32 [#allocation6], 4
      %s24 = int_to_ptr.vmem [resolvable:$true] %s23
      %29 = dma.hbm_to_vmem [thread:$0]  %s1, 4096, %s24, [#allocation3], 512, 512, 32
    $region9: #{tpu_custom_call.1} parent=1 // pred_fallthru
      _
    // Predicated region
    $region10: #{tpu_custom_call.1} parent=1 // pred_check
      _
    $region11: #{tpu_custom_call.1} parent=1 // pred_check_branch
      %31 = sbr.rel (0) target = $region13
    $region12: #{tpu_custom_call.1} parent=1 // pred_region
      %32 = dma.done [#allocation5], 16
    $region13: #{tpu_custom_call.1} parent=1 // pred_fallthru
      _
    // Predicated region
    $region14: #{tpu_custom_call.1} parent=1 // pred_check
      _
    $region15: #{tpu_custom_call.1} parent=1 // pred_check_branch
      %34 = sbr.rel (0) target = $region17
    $region16: #{tpu_custom_call.1} parent=1 // pred_region
      %35 = dma.done [#allocation3], 4096
    $region17: #{tpu_custom_call.1} parent=1 // pred_fallthru
      _
    %36 = sfence
    %s37 = sld [smem:[#allocation2]]
    %s38 = sld [smem:[#allocation2 + $0x1]]
    %v39 = vld [vmem:[#allocation6] sm:$0xff]
    %v40 = vld [vmem:[#allocation6 + $0x8] sm:$0xff]
    %v41 = vld [vmem:[#allocation6 + $0x10] sm:$0xff]
    %v42 = vld [vmem:[#allocation6 + $0x18] sm:$0xff]
    %v43 = vld [vmem:[#allocation6 + $0x20] sm:$0xff]
    %v44 = vld [vmem:[#allocation6 + $0x28] sm:$0xff]
    %v45 = vld [vmem:[#allocation6 + $0x30] sm:$0xff]
    %v46 = vld [vmem:[#allocation6 + $0x38] sm:$0xff]
    %v47 = vld [vmem:[#allocation6 + $0x40] sm:$0xff]
    %v48 = vld [vmem:[#allocation6 + $0x48] sm:$0xff]
    %v49 = vld [vmem:[#allocation6 + $0x50] sm:$0xff]
    %v50 = vld [vmem:[#allocation6 + $0x58] sm:$0xff]
    %v51 = vld [vmem:[#allocation6 + $0x60] sm:$0xff]
    %v52 = vld [vmem:[#allocation6 + $0x68] sm:$0xff]
    %v53 = vld [vmem:[#allocation6 + $0x70] sm:$0xff]
    %v54 = vld [vmem:[#allocation6 + $0x78] sm:$0xff]
    %v55 = vld [vmem:[#allocation6 + $0x80] sm:$0xff]
    %v56 = vld [vmem:[#allocation6 + $0x88] sm:$0xff]
    %v57 = vld [vmem:[#allocation6 + $0x90] sm:$0xff]
    %v58 = vld [vmem:[#allocation6 + $0x98] sm:$0xff]
    %v59 = vld [vmem:[#allocation6 + $0xa0] sm:$0xff]
    %v60 = vld [vmem:[#allocation6 + $0xa8] sm:$0xff]
    %v61 = vld [vmem:[#allocation6 + $0xb0] sm:$0xff]
    %v62 = vld [vmem:[#allocation6 + $0xb8] sm:$0xff]
    %v63 = vld [vmem:[#allocation6 + $0xc0] sm:$0xff]
    %v64 = vld [vmem:[#allocation6 + $0xc8] sm:$0xff]
    %v65 = vld [vmem:[#allocation6 + $0xd0] sm:$0xff]
    %v66 = vld [vmem:[#allocation6 + $0xd8] sm:$0xff]
    %v67 = vld [vmem:[#allocation6 + $0xe0] sm:$0xff]
    %v68 = vld [vmem:[#allocation6 + $0xe8] sm:$0xff]
    %v69 = vld [vmem:[#allocation6 + $0xf0] sm:$0xff]
    %v70 = vld [vmem:[#allocation6 + $0xf8] sm:$0xff]
    %v71 = vstv %s37
    %v72 = vmul.f32 %v39, %v71
    %v73 = vmul.f32 %v40, %v71
    %v74 = vmul.f32 %v41, %v71
    %v75 = vmul.f32 %v42, %v71
    %v76 = vmul.f32 %v43, %v71
    %v77 = vmul.f32 %v44, %v71
    %v78 = vmul.f32 %v45, %v71
    %v79 = vmul.f32 %v46, %v71
    %v80 = vmul.f32 %v47, %v71
    %v81 = vmul.f32 %v48, %v71
    %v82 = vmul.f32 %v49, %v71
    %v83 = vmul.f32 %v50, %v71
    %v84 = vmul.f32 %v51, %v71
    %v85 = vmul.f32 %v52, %v71
    %v86 = vmul.f32 %v53, %v71
    %v87 = vmul.f32 %v54, %v71
    %v88 = vmul.f32 %v55, %v71
    %v89 = vmul.f32 %v56, %v71
    %v90 = vmul.f32 %v57, %v71
    %v91 = vmul.f32 %v58, %v71
    %v92 = vmul.f32 %v59, %v71
    %v93 = vmul.f32 %v60, %v71
    %v94 = vmul.f32 %v61, %v71
    %v95 = vmul.f32 %v62, %v71
    %v96 = vmul.f32 %v63, %v71
    %v97 = vmul.f32 %v64, %v71
    %v98 = vmul.f32 %v65, %v71
    %v99 = vmul.f32 %v66, %v71
    %v100 = vmul.f32 %v67, %v71
    %v101 = vmul.f32 %v68, %v71
    %v102 = vmul.f32 %v69, %v71
    %v103 = vmul.f32 %v70, %v71
    %v104 = vstv %s38
    %v105 = vadd.f32 %v72, %v104
    %v106 = vadd.f32 %v73, %v104
    %v107 = vadd.f32 %v74, %v104
    %v108 = vadd.f32 %v75, %v104
    %v109 = vadd.f32 %v76, %v104
    %v110 = vadd.f32 %v77, %v104
    %v111 = vadd.f32 %v78, %v104
    %v112 = vadd.f32 %v79, %v104
    %v113 = vadd.f32 %v80, %v104
    %v114 = vadd.f32 %v81, %v104
    %v115 = vadd.f32 %v82, %v104
    %v116 = vadd.f32 %v83, %v104
    %v117 = vadd.f32 %v84, %v104
    %v118 = vadd.f32 %v85, %v104
    %v119 = vadd.f32 %v86, %v104
    %v120 = vadd.f32 %v87, %v104
    %v121 = vadd.f32 %v88, %v104
    %v122 = vadd.f32 %v89, %v104
    %v123 = vadd.f32 %v90, %v104
    %v124 = vadd.f32 %v91, %v104
    %v125 = vadd.f32 %v92, %v104
    %v126 = vadd.f32 %v93, %v104
    %v127 = vadd.f32 %v94, %v104
    %v128 = vadd.f32 %v95, %v104
    %v129 = vadd.f32 %v96, %v104
    %v130 = vadd.f32 %v97, %v104
    %v131 = vadd.f32 %v98, %v104
    %v132 = vadd.f32 %v99, %v104
    %v133 = vadd.f32 %v100, %v104
    %v134 = vadd.f32 %v101, %v104
    %v135 = vadd.f32 %v102, %v104
    %v136 = vadd.f32 %v103, %v104
    %137 = vst [vmem:[#allocation7] sm:$0xff] %v105
    %138 = vst [vmem:[#allocation7 + $0x8] sm:$0xff] %v106
    %139 = vst [vmem:[#allocation7 + $0x10] sm:$0xff] %v107
    %140 = vst [vmem:[#allocation7 + $0x18] sm:$0xff] %v108
    %141 = vst [vmem:[#allocation7 + $0x20] sm:$0xff] %v109
    %142 = vst [vmem:[#allocation7 + $0x28] sm:$0xff] %v110
    %143 = vst [vmem:[#allocation7 + $0x30] sm:$0xff] %v111
    %144 = vst [vmem:[#allocation7 + $0x38] sm:$0xff] %v112
    %145 = vst [vmem:[#allocation7 + $0x40] sm:$0xff] %v113
    %146 = vst [vmem:[#allocation7 + $0x48] sm:$0xff] %v114
    %147 = vst [vmem:[#allocation7 + $0x50] sm:$0xff] %v115
    %148 = vst [vmem:[#allocation7 + $0x58] sm:$0xff] %v116
    %149 = vst [vmem:[#allocation7 + $0x60] sm:$0xff] %v117
    %150 = vst [vmem:[#allocation7 + $0x68] sm:$0xff] %v118
    %151 = vst [vmem:[#allocation7 + $0x70] sm:$0xff] %v119
    %152 = vst [vmem:[#allocation7 + $0x78] sm:$0xff] %v120
    %153 = vst [vmem:[#allocation7 + $0x80] sm:$0xff] %v121
    %154 = vst [vmem:[#allocation7 + $0x88] sm:$0xff] %v122
    %155 = vst [vmem:[#allocation7 + $0x90] sm:$0xff] %v123
    %156 = vst [vmem:[#allocation7 + $0x98] sm:$0xff] %v124
    %157 = vst [vmem:[#allocation7 + $0xa0] sm:$0xff] %v125
    %158 = vst [vmem:[#allocation7 + $0xa8] sm:$0xff] %v126
    %159 = vst [vmem:[#allocation7 + $0xb0] sm:$0xff] %v127
    %160 = vst [vmem:[#allocation7 + $0xb8] sm:$0xff] %v128
    %161 = vst [vmem:[#allocation7 + $0xc0] sm:$0xff] %v129
    %162 = vst [vmem:[#allocation7 + $0xc8] sm:$0xff] %v130
    %163 = vst [vmem:[#allocation7 + $0xd0] sm:$0xff] %v131
    %164 = vst [vmem:[#allocation7 + $0xd8] sm:$0xff] %v132
    %165 = vst [vmem:[#allocation7 + $0xe0] sm:$0xff] %v133
    %166 = vst [vmem:[#allocation7 + $0xe8] sm:$0xff] %v134
    %167 = vst [vmem:[#allocation7 + $0xf0] sm:$0xff] %v135
    %168 = vst [vmem:[#allocation7 + $0xf8] sm:$0xff] %v136
    // Predicated region
    $region18: #{tpu_custom_call.1} parent=1 // pred_check
      _
    $region19: #{tpu_custom_call.1} parent=1 // pred_check_branch
      %170 = sbr.rel (0) target = $region21
    $region20: #{tpu_custom_call.1} parent=1 // pred_region
      %s172 = ssub.s32 4096, 4096
      %173 = vsyncadd [#allocation4], %s172
      %s174 = sshll.u32 [#allocation7], 4
      %s175 = int_to_ptr.vmem [resolvable:$true] %s174
      %180 = dma.vmem_to_hbm [thread:$0]  %s175, 4096, %s2, [#allocation4], 512, 512, 32
    $region21: #{tpu_custom_call.1} parent=1 // pred_fallthru
      _
    // Predicated region
    $region22: #{tpu_custom_call.1} parent=1 // pred_check
      _
    $region23: #{tpu_custom_call.1} parent=1 // pred_check_branch
      %182 = sbr.rel (0) target = $region25
    $region24: #{tpu_custom_call.1} parent=1 // pred_region
      %183 = dma.done [#allocation4], 4096
    $region25: #{tpu_custom_call.1} parent=1 // pred_fallthru
      _
    %184 = vsyncpa [#allocation3], 1
    %185 = vsyncpa [#allocation4], 1
    %186 = vsyncpa [#allocation5], 1

</llo_original>
